<compile_context>
chip_gen: v5e
topology: v5e:2x2
jax: 0.10.0
libtpu: 0.0.40
codegen_flags: <defaults>
</compile_context>

<pallas_src>
import jax
import jax.numpy as jnp
from jax.experimental import pallas as pl
from jax.experimental.pallas import tpu as pltpu

NEG_SLOPE = 0.01  # nn.LeakyReLU() default negative_slope
HIDDEN = (64, 128, 256)


def _leaky_relu(x):
    return jnp.where(x >= 0, x, NEG_SLOPE * x)


def _round_up(n, m):
    return ((n + m - 1) // m) * m


def dqnet_kernel(x_ref,
                 w1_ref, b1_ref,
                 w2_ref, b2_ref,
                 w3_ref, b3_ref,
                 w4_ref, b4_ref,
                 o_ref):
    # x_ref: (num_state, bm) f32, batch on the lane axis.
    xT = x_ref[...]
    num_state = xT.shape[0]

    # ---- layer 1: tiny contraction (K = num_state = 4) ----
    if num_state <= 8:
        # VPU broadcast-MAC: w1[:, k] (lane-broadcast) * xT[k, :] (sublane-
        # broadcast), statically unrolled.  Keeps one serially-dependent MXU
        # push/drain off the critical path for the degenerate K.
        w1 = w1_ref[...]                              # (64, num_state) f32
        h = b1_ref[...] + w1[:, 0:1] * xT[0:1, :]
        for k in range(1, num_state):                 # static unroll
            h = h + w1[:, k:k + 1] * xT[k:k + 1, :]
    else:
        h = jnp.dot(w1_ref[...], xT,
                    preferred_element_type=jnp.float32) + b1_ref[...]
    h = _leaky_relu(h)

    # ---- layers 2..4: bf16 MXU matmuls, f32 accumulation, lane-dense ----
    h = jnp.dot(w2_ref[...], h.astype(jnp.bfloat16),
                preferred_element_type=jnp.float32) + b2_ref[...]
    h = _leaky_relu(h)
    h = jnp.dot(w3_ref[...], h.astype(jnp.bfloat16),
                preferred_element_type=jnp.float32) + b3_ref[...]
    h = _leaky_relu(h)
    out = jnp.dot(w4_ref[...], h.astype(jnp.bfloat16),
                  preferred_element_type=jnp.float32) + b4_ref[...]
    o_ref[...] = out.astype(o_ref.dtype)              # (num_actions, bm)


def _choose_bm(batch, block_m):
    """Batch-tile size (lane axis inside the kernel).

    - Small batches (latency path): one tile covering the whole batch; a block
      dim equal to the full array dim is legal regardless of alignment.
    - Large batches (throughput path): multiple-of-128 tiles (lane-dense) and
      at least 2 grid steps so v7x's two TensorCores both get work; also keeps
      DMA/compute pipelining alive.
    """
    if batch <= 256:
        return batch
    bm = min(block_m, _round_up(pl.cdiv(batch, 2), 128))
    return max(bm, 128)


def dqnet_forward(x, params, *, block_m=2048):
    """x: (batch, num_state) f32.  params: output of prepare_params()."""
    (w1, b1), (w2, b2), (w3, b3), (w4, b4) = params    # W: (out, in), b: (out, 1)
    batch, num_state = x.shape
    num_actions = w4.shape[0]

    bm = _choose_bm(batch, block_m)
    grid = (pl.cdiv(batch, bm),)

    # Layout plumbing only (batch*4 floats): present batch on the lane axis.
    x_t = x.T                                          # (num_state, batch)

    flops = 2 * batch * (num_state * HIDDEN[0]
                         + HIDDEN[0] * HIDDEN[1]
                         + HIDDEN[1] * HIDDEN[2]
                         + HIDDEN[2] * num_actions)
    bytes_accessed = (x.size * 4 + batch * num_actions * 4
                      + w1.size * 4 + b1.size * 4
                      + w2.size * 2 + b2.size * 4
                      + w3.size * 2 + b3.size * 4
                      + w4.size * 2 + b4.size * 4)

    def resident(arr):
        # Same block for every grid step -> DMA'd once, stays resident in VMEM.
        return pl.BlockSpec(arr.shape, lambda i: (0,) * arr.ndim)

    out_t = pl.pallas_call(
        dqnet_kernel,
        out_shape=jax.ShapeDtypeStruct((num_actions, batch), jnp.float32),
        grid=grid,
        in_specs=[
            pl.BlockSpec((num_state, bm), lambda i: (0, i)),
            resident(w1), resident(b1),
            resident(w2), resident(b2),
            resident(w3), resident(b3),
            resident(w4), resident(b4),
        ],
        out_specs=pl.BlockSpec((num_actions, bm), lambda i: (0, i)),
        compiler_params=pltpu.CompilerParams(
            # Batch tiles are independent: shard across both v7x TensorCores;
            # harmless no-op on single-TC v5e/v6e.
            dimension_semantics=("parallel",),
        ),
        cost_estimate=pl.CostEstimate(
            flops=int(flops), transcendentals=0,
            bytes_accessed=int(bytes_accessed)),
    )(x_t, w1, b1, w2, b2, w3, b3, w4, b4)

    return out_t.T                                     # (batch, num_actions)


def init_params(key, num_state, num_actions):
    """PyTorch-Linear-style init, kept in PyTorch layout: W (out, in), b (out, 1)."""
    dims = [num_state, *HIDDEN, num_actions]
    params = []
    for i in range(4):
        key, kw, kb = jax.random.split(key, 3)
        fan_in, fan_out = dims[i], dims[i + 1]
        bound = 1.0 / (fan_in ** 0.5)
        w = jax.random.uniform(kw, (fan_out, fan_in), jnp.float32, -bound, bound)
        b = jax.random.uniform(kb, (fan_out, 1), jnp.float32, -bound, bound)
        params.append((w, b))
    return params


def prepare_params(params_f32):
    """Cast the large weights to bf16 once (MXU-native, half the resident
    bytes); keep the tiny w1 (VPU path) and all biases in f32."""
    (w1, b1), (w2, b2), (w3, b3), (w4, b4) = params_f32
    return ((w1, b1),
            (w2.astype(jnp.bfloat16), b2),
            (w3.astype(jnp.bfloat16), b3),
            (w4.astype(jnp.bfloat16), b4))


def dqnet_reference(x, params_f32):
    """Pure-f32 reference matching the original PyTorch module (x @ W.T + b)."""
    h = x
    for i, (w, b) in enumerate(params_f32):
        h = h @ w.T + b[:, 0]
        if i < 3:
            h = _leaky_relu(h)
    return h


def dqnet_reference_kernel_math(x, params_dev):
    """Reference mirroring the kernel's feature-major bf16/f32 math exactly."""
    (w1, b1), (w2, b2), (w3, b3), (w4, b4) = params_dev
    hT = x.T
    hT = _leaky_relu(jnp.dot(w1, hT, preferred_element_type=jnp.float32) + b1)
    hT = _leaky_relu(jnp.dot(w2, hT.astype(jnp.bfloat16),
                             preferred_element_type=jnp.float32) + b2)
    hT = _leaky_relu(jnp.dot(w3, hT.astype(jnp.bfloat16),
                             preferred_element_type=jnp.float32) + b3)
    hT = jnp.dot(w4, hT.astype(jnp.bfloat16),
                 preferred_element_type=jnp.float32) + b4
    return hT.T


if __name__ == "__main__":
    num_state = 4      # car env observation size (small)
    num_actions = 3    # discrete actions

    key = jax.random.PRNGKey(0)
    key_x1, key_x2, key_p = jax.random.split(key, 3)

    params_f32 = init_params(key_p, num_state, num_actions)
    params_dev = prepare_params(params_f32)

    # batch=8:  single-tile latency path (grid=(1,), block == full array dims).
    # batch=260: throughput path — bm=256, grid=(2,), exercises resident
    #            weights, pipelining and the ragged (4-valid-lane) last tile
    #            with no wrapper-side pad/slice.
    for batch, key_x in ((8, key_x1), (260, key_x2)):
        x = jax.random.normal(key_x, (batch, num_state), jnp.float32)
        out = jax.block_until_ready(dqnet_forward(x, params_dev))
        assert out.shape == (batch, num_actions)
        assert bool(jnp.all(jnp.isfinite(out)))

        tight = dqnet_reference_kernel_math(x, params_dev)
        assert jnp.allclose(out, tight, atol=1e-3, rtol=1e-3), \
            "Pallas kernel mismatch vs bf16-emulating reference"

        # NOTE: bf16 layers give ~1e-2 relative error vs the f32 PyTorch net;
        # acceptable here, keep an f32 path if exact greedy-argmax is needed.
        loose = dqnet_reference(x, params_f32)
        assert jnp.allclose(out, loose, atol=2e-2, rtol=2e-2), \
            "Pallas kernel mismatch vs f32 PyTorch-equivalent reference"

    print("KERNEL_OK")
</pallas_src>

<mosaic_0001>
module attributes {stable_mosaic.version = 11 : i64} {
  func.func @dqnet_kernel(%arg0: i32, %arg1: memref<4x8xf32, #tpu.memory_space<vmem>>, %arg2: memref<64x4xf32, #tpu.memory_space<vmem>>, %arg3: memref<64x1xf32, #tpu.memory_space<vmem>>, %arg4: memref<128x64xbf16, #tpu.memory_space<vmem>>, %arg5: memref<128x1xf32, #tpu.memory_space<vmem>>, %arg6: memref<256x128xbf16, #tpu.memory_space<vmem>>, %arg7: memref<256x1xf32, #tpu.memory_space<vmem>>, %arg8: memref<3x256xbf16, #tpu.memory_space<vmem>>, %arg9: memref<3x1xf32, #tpu.memory_space<vmem>>, %arg10: memref<3x8xf32, #tpu.memory_space<vmem>>) attributes {dimension_semantics = [#tpu.dimension_semantics<parallel>], iteration_bounds = array<i64: 1>, scalar_prefetch = 0 : i64, scratch_operands = 0 : i64, tpu.core_type = #tpu.core_type<tc>, window_params = [{transform_indices = @transform_0, window_bounds = array<i64: 4, 8>}, {pipeline_mode = #tpu.pipeline_mode<synchronous>, transform_indices = @transform_1, window_bounds = array<i64: 64, 4>}, {pipeline_mode = #tpu.pipeline_mode<synchronous>, transform_indices = @transform_2, window_bounds = array<i64: 64, 1>}, {pipeline_mode = #tpu.pipeline_mode<synchronous>, transform_indices = @transform_3, window_bounds = array<i64: 128, 64>}, {pipeline_mode = #tpu.pipeline_mode<synchronous>, transform_indices = @transform_4, window_bounds = array<i64: 128, 1>}, {pipeline_mode = #tpu.pipeline_mode<synchronous>, transform_indices = @transform_5, window_bounds = array<i64: 256, 128>}, {pipeline_mode = #tpu.pipeline_mode<synchronous>, transform_indices = @transform_6, window_bounds = array<i64: 256, 1>}, {pipeline_mode = #tpu.pipeline_mode<synchronous>, transform_indices = @transform_7, window_bounds = array<i64: 3, 256>}, {pipeline_mode = #tpu.pipeline_mode<synchronous>, transform_indices = @transform_8, window_bounds = array<i64: 3, 1>}, {transform_indices = @transform_9, window_bounds = array<i64: 3, 8>}]} {
    %c0 = arith.constant 0 : index
    %c0_0 = arith.constant 0 : index
    %0 = vector.load %arg1[%c0, %c0_0] : memref<4x8xf32, #tpu.memory_space<vmem>>, vector<4x8xf32>
    %c0_1 = arith.constant 0 : index
    %c0_2 = arith.constant 0 : index
    %1 = vector.load %arg2[%c0_1, %c0_2] : memref<64x4xf32, #tpu.memory_space<vmem>>, vector<64x4xf32>
    %c0_3 = arith.constant 0 : index
    %c0_4 = arith.constant 0 : index
    %2 = vector.load %arg3[%c0_3, %c0_4] : memref<64x1xf32, #tpu.memory_space<vmem>>, vector<64x1xf32>
    %3 = vector.extract_strided_slice %1 {offsets = [0, 0], sizes = [64, 1], strides = [1, 1]} : vector<64x4xf32> to vector<64x1xf32>
    %4 = vector.extract_strided_slice %0 {offsets = [0, 0], sizes = [1, 8], strides = [1, 1]} : vector<4x8xf32> to vector<1x8xf32>
    %5 = vector.broadcast %3 : vector<64x1xf32> to vector<64x8xf32>
    %6 = vector.broadcast %4 : vector<1x8xf32> to vector<64x8xf32>
    %7 = arith.mulf %5, %6 : vector<64x8xf32>
    %8 = vector.broadcast %2 : vector<64x1xf32> to vector<64x8xf32>
    %9 = arith.addf %8, %7 : vector<64x8xf32>
    %10 = vector.extract_strided_slice %1 {offsets = [0, 1], sizes = [64, 1], strides = [1, 1]} : vector<64x4xf32> to vector<64x1xf32>
    %11 = vector.extract_strided_slice %0 {offsets = [1, 0], sizes = [1, 8], strides = [1, 1]} : vector<4x8xf32> to vector<1x8xf32>
    %12 = vector.broadcast %10 : vector<64x1xf32> to vector<64x8xf32>
    %13 = vector.broadcast %11 : vector<1x8xf32> to vector<64x8xf32>
    %14 = arith.mulf %12, %13 : vector<64x8xf32>
    %15 = arith.addf %9, %14 : vector<64x8xf32>
    %16 = vector.extract_strided_slice %1 {offsets = [0, 2], sizes = [64, 1], strides = [1, 1]} : vector<64x4xf32> to vector<64x1xf32>
    %17 = vector.extract_strided_slice %0 {offsets = [2, 0], sizes = [1, 8], strides = [1, 1]} : vector<4x8xf32> to vector<1x8xf32>
    %18 = vector.broadcast %16 : vector<64x1xf32> to vector<64x8xf32>
    %19 = vector.broadcast %17 : vector<1x8xf32> to vector<64x8xf32>
    %20 = arith.mulf %18, %19 : vector<64x8xf32>
    %21 = arith.addf %15, %20 : vector<64x8xf32>
    %22 = vector.extract_strided_slice %1 {offsets = [0, 3], sizes = [64, 1], strides = [1, 1]} : vector<64x4xf32> to vector<64x1xf32>
    %23 = vector.extract_strided_slice %0 {offsets = [3, 0], sizes = [1, 8], strides = [1, 1]} : vector<4x8xf32> to vector<1x8xf32>
    %24 = vector.broadcast %22 : vector<64x1xf32> to vector<64x8xf32>
    %25 = vector.broadcast %23 : vector<1x8xf32> to vector<64x8xf32>
    %26 = arith.mulf %24, %25 : vector<64x8xf32>
    %27 = arith.addf %21, %26 : vector<64x8xf32>
    %cst = arith.constant 0.000000e+00 : f32
    %28 = vector.broadcast %cst : f32 to vector<64x8xf32>
    %29 = arith.cmpf oge, %27, %28 : vector<64x8xf32>
    %cst_5 = arith.constant 0.00999999977 : f32
    %30 = vector.broadcast %cst_5 : f32 to vector<64x8xf32>
    %31 = arith.mulf %30, %27 : vector<64x8xf32>
    %32 = arith.select %29, %27, %31 : vector<64x8xi1>, vector<64x8xf32>
    %c0_6 = arith.constant 0 : index
    %c0_7 = arith.constant 0 : index
    %33 = vector.load %arg4[%c0_6, %c0_7] : memref<128x64xbf16, #tpu.memory_space<vmem>>, vector<128x64xbf16>
    %34 = arith.truncf %32 : vector<64x8xf32> to vector<64x8xbf16>
    %cst_8 = arith.constant dense<0.000000e+00> : vector<128x8xf32>
    %35 = tpu.matmul %33, %34, %cst_8 {dimension_numbers = #tpu.dot_dimension_numbers<[1], [0], [0], [1], [0, 0, 1, 1], [], []>} : vector<128x64xbf16>, vector<64x8xbf16>, vector<128x8xf32> -> vector<128x8xf32>
    %c0_9 = arith.constant 0 : index
    %c0_10 = arith.constant 0 : index
    %36 = vector.load %arg5[%c0_9, %c0_10] : memref<128x1xf32, #tpu.memory_space<vmem>>, vector<128x1xf32>
    %37 = vector.broadcast %36 : vector<128x1xf32> to vector<128x8xf32>
    %38 = arith.addf %35, %37 : vector<128x8xf32>
    %cst_11 = arith.constant 0.000000e+00 : f32
    %39 = vector.broadcast %cst_11 : f32 to vector<128x8xf32>
    %40 = arith.cmpf oge, %38, %39 : vector<128x8xf32>
    %cst_12 = arith.constant 0.00999999977 : f32
    %41 = vector.broadcast %cst_12 : f32 to vector<128x8xf32>
    %42 = arith.mulf %41, %38 : vector<128x8xf32>
    %43 = arith.select %40, %38, %42 : vector<128x8xi1>, vector<128x8xf32>
    %c0_13 = arith.constant 0 : index
    %c0_14 = arith.constant 0 : index
    %44 = vector.load %arg6[%c0_13, %c0_14] : memref<256x128xbf16, #tpu.memory_space<vmem>>, vector<256x128xbf16>
    %45 = arith.truncf %43 : vector<128x8xf32> to vector<128x8xbf16>
    %cst_15 = arith.constant dense<0.000000e+00> : vector<256x8xf32>
    %46 = tpu.matmul %44, %45, %cst_15 {dimension_numbers = #tpu.dot_dimension_numbers<[1], [0], [0], [1], [0, 0, 1, 1], [], []>} : vector<256x128xbf16>, vector<128x8xbf16>, vector<256x8xf32> -> vector<256x8xf32>
    %c0_16 = arith.constant 0 : index
    %c0_17 = arith.constant 0 : index
    %47 = vector.load %arg7[%c0_16, %c0_17] : memref<256x1xf32, #tpu.memory_space<vmem>>, vector<256x1xf32>
    %48 = vector.broadcast %47 : vector<256x1xf32> to vector<256x8xf32>
    %49 = arith.addf %46, %48 : vector<256x8xf32>
    %cst_18 = arith.constant 0.000000e+00 : f32
    %50 = vector.broadcast %cst_18 : f32 to vector<256x8xf32>
    %51 = arith.cmpf oge, %49, %50 : vector<256x8xf32>
    %cst_19 = arith.constant 0.00999999977 : f32
    %52 = vector.broadcast %cst_19 : f32 to vector<256x8xf32>
    %53 = arith.mulf %52, %49 : vector<256x8xf32>
    %54 = arith.select %51, %49, %53 : vector<256x8xi1>, vector<256x8xf32>
    %c0_20 = arith.constant 0 : index
    %c0_21 = arith.constant 0 : index
    %55 = vector.load %arg8[%c0_20, %c0_21] : memref<3x256xbf16, #tpu.memory_space<vmem>>, vector<3x256xbf16>
    %56 = arith.truncf %54 : vector<256x8xf32> to vector<256x8xbf16>
    %cst_22 = arith.constant dense<0.000000e+00> : vector<3x8xf32>
    %57 = tpu.matmul %55, %56, %cst_22 {dimension_numbers = #tpu.dot_dimension_numbers<[1], [0], [0], [1], [0, 0, 1, 1], [], []>} : vector<3x256xbf16>, vector<256x8xbf16>, vector<3x8xf32> -> vector<3x8xf32>
    %c0_23 = arith.constant 0 : index
    %c0_24 = arith.constant 0 : index
    %58 = vector.load %arg9[%c0_23, %c0_24] : memref<3x1xf32, #tpu.memory_space<vmem>>, vector<3x1xf32>
    %59 = vector.broadcast %58 : vector<3x1xf32> to vector<3x8xf32>
    %60 = arith.addf %57, %59 : vector<3x8xf32>
    %c0_25 = arith.constant 0 : index
    %c0_26 = arith.constant 0 : index
    %61 = vector.load %arg10[%c0_25, %c0_26] : memref<3x8xf32, #tpu.memory_space<vmem>>, vector<3x8xf32>
    tpu.vector_store %arg10[%c0_25, %c0_26], %60 {strides = array<i32>} : memref<3x8xf32, #tpu.memory_space<vmem>>, vector<3x8xf32>,
    return
  }
  func.func @transform_0(%arg0: i32) -> (i32, i32) {
    %c0_i32 = arith.constant 0 : i32
    %c0_i32_0 = arith.constant 0 : i32
    return %c0_i32, %arg0 : i32, i32
  }
  func.func @transform_1(%arg0: i32) -> (i32, i32) {
    %c0_i32 = arith.constant 0 : i32
    %c0_i32_0 = arith.constant 0 : i32
    %c0_i32_1 = arith.constant 0 : i32
    return %c0_i32, %c0_i32_0 : i32, i32
  }
  func.func @transform_2(%arg0: i32) -> (i32, i32) {
    %c0_i32 = arith.constant 0 : i32
    %c0_i32_0 = arith.constant 0 : i32
    %c0_i32_1 = arith.constant 0 : i32
    return %c0_i32, %c0_i32_0 : i32, i32
  }
  func.func @transform_3(%arg0: i32) -> (i32, i32) {
    %c0_i32 = arith.constant 0 : i32
    %c0_i32_0 = arith.constant 0 : i32
    %c0_i32_1 = arith.constant 0 : i32
    return %c0_i32, %c0_i32_0 : i32, i32
  }
  func.func @transform_4(%arg0: i32) -> (i32, i32) {
    %c0_i32 = arith.constant 0 : i32
    %c0_i32_0 = arith.constant 0 : i32
    %c0_i32_1 = arith.constant 0 : i32
    return %c0_i32, %c0_i32_0 : i32, i32
  }
  func.func @transform_5(%arg0: i32) -> (i32, i32) {
    %c0_i32 = arith.constant 0 : i32
    %c0_i32_0 = arith.constant 0 : i32
    %c0_i32_1 = arith.constant 0 : i32
    return %c0_i32, %c0_i32_0 : i32, i32
  }
  func.func @transform_6(%arg0: i32) -> (i32, i32) {
    %c0_i32 = arith.constant 0 : i32
    %c0_i32_0 = arith.constant 0 : i32
    %c0_i32_1 = arith.constant 0 : i32
    return %c0_i32, %c0_i32_0 : i32, i32
  }
  func.func @transform_7(%arg0: i32) -> (i32, i32) {
    %c0_i32 = arith.constant 0 : i32
    %c0_i32_0 = arith.constant 0 : i32
    %c0_i32_1 = arith.constant 0 : i32
    return %c0_i32, %c0_i32_0 : i32, i32
  }
  func.func @transform_8(%arg0: i32) -> (i32, i32) {
    %c0_i32 = arith.constant 0 : i32
    %c0_i32_0 = arith.constant 0 : i32
    %c0_i32_1 = arith.constant 0 : i32
    return %c0_i32, %c0_i32_0 : i32, i32
  }
  func.func @transform_9(%arg0: i32) -> (i32, i32) {
    %c0_i32 = arith.constant 0 : i32
    %c0_i32_0 = arith.constant 0 : i32
    return %c0_i32, %arg0 : i32, i32
  }
}

</mosaic_0001>

<llo_original>
// kernel: tpu_custom_call.1
$region0: #{tpu_custom_call.1}
  #allocation0 [shape = 'u32[]', space=smem, size = 0x4, offset = 0x4, fixed_abs, tag = 'smem constant byte address 0x4 - core index']
  #allocation1 [shape = 'u32[72,128]{1,0:T(1,128)}', space=vmem, size = 0x9000, scoped, tag = 'internal scratch']
  %s0 = inlined_call_operand.vmem [shape: f32[4,8], index: 0, kind: input, shape index: {}]
  %s1 = inlined_call_operand.vmem [shape: f32[64,4], index: 1, kind: input, shape index: {}]
  %s2 = inlined_call_operand.vmem [shape: f32[64,1], index: 2, kind: input, shape index: {}]
  %s3 = inlined_call_operand.vmem [shape: bf16[128,64], index: 3, kind: input, shape index: {}]
  %s4 = inlined_call_operand.vmem [shape: f32[128,1], index: 4, kind: input, shape index: {}]
  %s5 = inlined_call_operand.vmem [shape: bf16[256,128], index: 5, kind: input, shape index: {}]
  %s6 = inlined_call_operand.vmem [shape: f32[256,1], index: 6, kind: input, shape index: {}]
  %s7 = inlined_call_operand.vmem [shape: bf16[3,256], index: 7, kind: input, shape index: {}]
  %s8 = inlined_call_operand.vmem [shape: f32[3,1], index: 8, kind: input, shape index: {}]
  %s9 = inlined_call_operand.hbm [shape: f32[3,8], index: 9, kind: output, shape index: {}]
  %s10 = sld [smem:[#allocation0]]
  $region46: #{tpu_custom_call.1} parent=0
    _
  %s12 = ssub.s32 1, %s10
  %s13 = scalar_select 0, %s12, %s10
  $region1: #{tpu_custom_call.1} parent=0
    #allocation2 [shape = 'u8[2048]{0}', space=vmem, size = 0x800, scoped, tag = 'output window, operand 0, single buffered']
    #allocation3 [shape = 's32[1]{0}', space=sflag, size = 0x4, scoped, tag = 'scoped memory for tpu_custom_call.1']
    %14 = vsyncpa [#allocation3], 0
    // Predicated region
    $region2: #{tpu_custom_call.1} parent=1 // pred_check
      _
    $region3: #{tpu_custom_call.1} parent=1 // pred_check_branch
      %16 = sbr.rel (0) target = $region5
    $region4: #{tpu_custom_call.1} parent=1 // pred_region
      _
    $region5: #{tpu_custom_call.1} parent=1 // pred_fallthru
      _
    // Predicated region
    $region6: #{tpu_custom_call.1} parent=1 // pred_check
      _
    $region7: #{tpu_custom_call.1} parent=1 // pred_check_branch
      %18 = sbr.rel (0) target = $region9
    $region8: #{tpu_custom_call.1} parent=1 // pred_region
      _
    $region9: #{tpu_custom_call.1} parent=1 // pred_fallthru
      _
    // Predicated region
    $region10: #{tpu_custom_call.1} parent=1 // pred_check
      _
    $region11: #{tpu_custom_call.1} parent=1 // pred_check_branch
      %20 = sbr.rel (0) target = $region13
    $region12: #{tpu_custom_call.1} parent=1 // pred_region
      _
    $region13: #{tpu_custom_call.1} parent=1 // pred_fallthru
      _
    // Predicated region
    $region14: #{tpu_custom_call.1} parent=1 // pred_check
      _
    $region15: #{tpu_custom_call.1} parent=1 // pred_check_branch
      %22 = sbr.rel (0) target = $region17
    $region16: #{tpu_custom_call.1} parent=1 // pred_region
      _
    $region17: #{tpu_custom_call.1} parent=1 // pred_fallthru
      _
    // Predicated region
    $region18: #{tpu_custom_call.1} parent=1 // pred_check
      _
    $region19: #{tpu_custom_call.1} parent=1 // pred_check_branch
      %24 = sbr.rel (0) target = $region21
    $region20: #{tpu_custom_call.1} parent=1 // pred_region
      _
    $region21: #{tpu_custom_call.1} parent=1 // pred_fallthru
      _
    // Predicated region
    $region22: #{tpu_custom_call.1} parent=1 // pred_check
      _
    $region23: #{tpu_custom_call.1} parent=1 // pred_check_branch
      %26 = sbr.rel (0) target = $region25
    $region24: #{tpu_custom_call.1} parent=1 // pred_region
      _
    $region25: #{tpu_custom_call.1} parent=1 // pred_fallthru
      _
    // Predicated region
    $region26: #{tpu_custom_call.1} parent=1 // pred_check
      _
    $region27: #{tpu_custom_call.1} parent=1 // pred_check_branch
      %28 = sbr.rel (0) target = $region29
    $region28: #{tpu_custom_call.1} parent=1 // pred_region
      _
    $region29: #{tpu_custom_call.1} parent=1 // pred_fallthru
      _
    // Predicated region
    $region30: #{tpu_custom_call.1} parent=1 // pred_check
      _
    $region31: #{tpu_custom_call.1} parent=1 // pred_check_branch
      %30 = sbr.rel (0) target = $region33
    $region32: #{tpu_custom_call.1} parent=1 // pred_region
      _
    $region33: #{tpu_custom_call.1} parent=1 // pred_fallthru
      _
    // Predicated region
    $region34: #{tpu_custom_call.1} parent=1 // pred_check
      _
    $region35: #{tpu_custom_call.1} parent=1 // pred_check_branch
      %32 = sbr.rel (0) target = $region37
    $region36: #{tpu_custom_call.1} parent=1 // pred_region
      _
    $region37: #{tpu_custom_call.1} parent=1 // pred_fallthru
      _
    %v34 = vld [vmem:[%s0] sm:$0xf]
    %v35 = vld [vmem:[%s1] sm:$0xff]
    %v36 = vld [vmem:[%s1 + $0x8] sm:$0xff]
    %v37 = vld [vmem:[%s1 + $0x10] sm:$0xff]
    %v38 = vld [vmem:[%s1 + $0x18] sm:$0xff]
    %v39 = vld [vmem:[%s1 + $0x20] sm:$0xff]
    %v40 = vld [vmem:[%s1 + $0x28] sm:$0xff]
    %v41 = vld [vmem:[%s1 + $0x30] sm:$0xff]
    %v42 = vld [vmem:[%s1 + $0x38] sm:$0xff]
    %v43 = vld [vmem:[%s2] sm:$0xff]
    %v44 = vld [vmem:[%s2 + $0x8] sm:$0xff]
    %v45 = vld [vmem:[%s2 + $0x10] sm:$0xff]
    %v46 = vld [vmem:[%s2 + $0x18] sm:$0xff]
    %v47 = vld [vmem:[%s2 + $0x20] sm:$0xff]
    %v48 = vld [vmem:[%s2 + $0x28] sm:$0xff]
    %v49 = vld [vmem:[%s2 + $0x30] sm:$0xff]
    %v50 = vld [vmem:[%s2 + $0x38] sm:$0xff]
    %52 = vset.pattern.permute.xlu0 0
    %53 = vperm.xlu0 %52, %v35
    %v54 = vpop.permute.xlu0 %53
    %57 = vset.pattern.permute.xlu0 0
    %58 = vperm.xlu0 %57, %v36
    %v59 = vpop.permute.xlu0 %58
    %62 = vset.pattern.permute.xlu0 0
    %63 = vperm.xlu0 %62, %v37
    %v64 = vpop.permute.xlu0 %63
    %67 = vset.pattern.permute.xlu0 0
    %68 = vperm.xlu0 %67, %v38
    %v69 = vpop.permute.xlu0 %68
    %72 = vset.pattern.permute.xlu0 0
    %73 = vperm.xlu0 %72, %v39
    %v74 = vpop.permute.xlu0 %73
    %77 = vset.pattern.permute.xlu0 0
    %78 = vperm.xlu0 %77, %v40
    %v79 = vpop.permute.xlu0 %78
    %82 = vset.pattern.permute.xlu0 0
    %83 = vperm.xlu0 %82, %v41
    %v84 = vpop.permute.xlu0 %83
    %87 = vset.pattern.permute.xlu0 0
    %88 = vperm.xlu0 %87, %v42
    %v89 = vpop.permute.xlu0 %88
    %v91 = vperm.slane %v34, 0
    %v92 = vmul.f32 %v54, %v91
    %v93 = vmul.f32 %v59, %v91
    %v94 = vmul.f32 %v64, %v91
    %v95 = vmul.f32 %v69, %v91
    %v96 = vmul.f32 %v74, %v91
    %v97 = vmul.f32 %v79, %v91
    %v98 = vmul.f32 %v84, %v91
    %v99 = vmul.f32 %v89, %v91
    %101 = vset.pattern.permute.xlu0 0
    %102 = vperm.xlu0 %101, %v43
    %v103 = vpop.permute.xlu0 %102
    %106 = vset.pattern.permute.xlu0 0
    %107 = vperm.xlu0 %106, %v44
    %v108 = vpop.permute.xlu0 %107
    %111 = vset.pattern.permute.xlu0 0
    %112 = vperm.xlu0 %111, %v45
    %v113 = vpop.permute.xlu0 %112
    %116 = vset.pattern.permute.xlu0 0
    %117 = vperm.xlu0 %116, %v46
    %v118 = vpop.permute.xlu0 %117
    %121 = vset.pattern.permute.xlu0 0
    %122 = vperm.xlu0 %121, %v47
    %v123 = vpop.permute.xlu0 %122
    %126 = vset.pattern.permute.xlu0 0
    %127 = vperm.xlu0 %126, %v48
    %v128 = vpop.permute.xlu0 %127
    %131 = vset.pattern.permute.xlu0 0
    %132 = vperm.xlu0 %131, %v49
    %v133 = vpop.permute.xlu0 %132
    %136 = vset.pattern.permute.xlu0 0
    %137 = vperm.xlu0 %136, %v50
    %v138 = vpop.permute.xlu0 %137
    %v140 = vadd.f32 %v103, %v92
    %v141 = vadd.f32 %v108, %v93
    %v142 = vadd.f32 %v113, %v94
    %v143 = vadd.f32 %v118, %v95
    %v144 = vadd.f32 %v123, %v96
    %v145 = vadd.f32 %v128, %v97
    %v146 = vadd.f32 %v133, %v98
    %v147 = vadd.f32 %v138, %v99
    %148 = vset.pattern.permute.xlu0 1
    %149 = vperm.xlu0 %148, %v35
    %v150 = vpop.permute.xlu0 %149
    %152 = vset.pattern.permute.xlu0 1
    %153 = vperm.xlu0 %152, %v36
    %v154 = vpop.permute.xlu0 %153
    %156 = vset.pattern.permute.xlu0 1
    %157 = vperm.xlu0 %156, %v37
    %v158 = vpop.permute.xlu0 %157
    %160 = vset.pattern.permute.xlu0 1
    %161 = vperm.xlu0 %160, %v38
    %v162 = vpop.permute.xlu0 %161
    %164 = vset.pattern.permute.xlu0 1
    %165 = vperm.xlu0 %164, %v39
    %v166 = vpop.permute.xlu0 %165
    %168 = vset.pattern.permute.xlu0 1
    %169 = vperm.xlu0 %168, %v40
    %v170 = vpop.permute.xlu0 %169
    %172 = vset.pattern.permute.xlu0 1
    %173 = vperm.xlu0 %172, %v41
    %v174 = vpop.permute.xlu0 %173
    %176 = vset.pattern.permute.xlu0 1
    %177 = vperm.xlu0 %176, %v42
    %v178 = vpop.permute.xlu0 %177
    %v180 = vperm.slane %v34, 1
    %v181 = vmul.f32 %v150, %v180
    %v182 = vmul.f32 %v154, %v180
    %v183 = vmul.f32 %v158, %v180
    %v184 = vmul.f32 %v162, %v180
    %v185 = vmul.f32 %v166, %v180
    %v186 = vmul.f32 %v170, %v180
    %v187 = vmul.f32 %v174, %v180
    %v188 = vmul.f32 %v178, %v180
    %v189 = vadd.f32 %v140, %v181
    %v190 = vadd.f32 %v141, %v182
    %v191 = vadd.f32 %v142, %v183
    %v192 = vadd.f32 %v143, %v184
    %v193 = vadd.f32 %v144, %v185
    %v194 = vadd.f32 %v145, %v186
    %v195 = vadd.f32 %v146, %v187
    %v196 = vadd.f32 %v147, %v188
    %197 = vset.pattern.permute.xlu0 2
    %198 = vperm.xlu0 %197, %v35
    %v199 = vpop.permute.xlu0 %198
    %201 = vset.pattern.permute.xlu0 2
    %202 = vperm.xlu0 %201, %v36
    %v203 = vpop.permute.xlu0 %202
    %205 = vset.pattern.permute.xlu0 2
    %206 = vperm.xlu0 %205, %v37
    %v207 = vpop.permute.xlu0 %206
    %209 = vset.pattern.permute.xlu0 2
    %210 = vperm.xlu0 %209, %v38
    %v211 = vpop.permute.xlu0 %210
    %213 = vset.pattern.permute.xlu0 2
    %214 = vperm.xlu0 %213, %v39
    %v215 = vpop.permute.xlu0 %214
    %217 = vset.pattern.permute.xlu0 2
    %218 = vperm.xlu0 %217, %v40
    %v219 = vpop.permute.xlu0 %218
    %221 = vset.pattern.permute.xlu0 2
    %222 = vperm.xlu0 %221, %v41
    %v223 = vpop.permute.xlu0 %222
    %225 = vset.pattern.permute.xlu0 2
    %226 = vperm.xlu0 %225, %v42
    %v227 = vpop.permute.xlu0 %226
    %v229 = vperm.slane %v34, 2
    %v230 = vmul.f32 %v199, %v229
    %v231 = vmul.f32 %v203, %v229
    %v232 = vmul.f32 %v207, %v229
    %v233 = vmul.f32 %v211, %v229
    %v234 = vmul.f32 %v215, %v229
    %v235 = vmul.f32 %v219, %v229
    %v236 = vmul.f32 %v223, %v229
    %v237 = vmul.f32 %v227, %v229
    %v238 = vadd.f32 %v189, %v230
    %v239 = vadd.f32 %v190, %v231
    %v240 = vadd.f32 %v191, %v232
    %v241 = vadd.f32 %v192, %v233
    %v242 = vadd.f32 %v193, %v234
    %v243 = vadd.f32 %v194, %v235
    %v244 = vadd.f32 %v195, %v236
    %v245 = vadd.f32 %v196, %v237
    %246 = vset.pattern.permute.xlu0 3
    %247 = vperm.xlu0 %246, %v35
    %v248 = vpop.permute.xlu0 %247
    %250 = vset.pattern.permute.xlu0 3
    %251 = vperm.xlu0 %250, %v36
    %v252 = vpop.permute.xlu0 %251
    %254 = vset.pattern.permute.xlu0 3
    %255 = vperm.xlu0 %254, %v37
    %v256 = vpop.permute.xlu0 %255
    %258 = vset.pattern.permute.xlu0 3
    %259 = vperm.xlu0 %258, %v38
    %v260 = vpop.permute.xlu0 %259
    %262 = vset.pattern.permute.xlu0 3
    %263 = vperm.xlu0 %262, %v39
    %v264 = vpop.permute.xlu0 %263
    %266 = vset.pattern.permute.xlu0 3
    %267 = vperm.xlu0 %266, %v40
    %v268 = vpop.permute.xlu0 %267
    %270 = vset.pattern.permute.xlu0 3
    %271 = vperm.xlu0 %270, %v41
    %v272 = vpop.permute.xlu0 %271
    %274 = vset.pattern.permute.xlu0 3
    %275 = vperm.xlu0 %274, %v42
    %v276 = vpop.permute.xlu0 %275
    %v278 = vperm.slane %v34, 3
    %v279 = vmul.f32 %v248, %v278
    %v280 = vmul.f32 %v252, %v278
    %v281 = vmul.f32 %v256, %v278
    %v282 = vmul.f32 %v260, %v278
    %v283 = vmul.f32 %v264, %v278
    %v284 = vmul.f32 %v268, %v278
    %v285 = vmul.f32 %v272, %v278
    %v286 = vmul.f32 %v276, %v278
    %v287 = vadd.f32 %v238, %v279
    %v288 = vadd.f32 %v239, %v280
    %v289 = vadd.f32 %v240, %v281
    %v290 = vadd.f32 %v241, %v282
    %v291 = vadd.f32 %v242, %v283
    %v292 = vadd.f32 %v243, %v284
    %v293 = vadd.f32 %v244, %v285
    %v294 = vadd.f32 %v245, %v286
    %vm295 = vcmp.ge.f32.partialorder %v287, 0.0
    %vm296 = vcmp.ge.f32.partialorder %v288, 0.0
    %vm297 = vcmp.ge.f32.partialorder %v289, 0.0
    %vm298 = vcmp.ge.f32.partialorder %v290, 0.0
    %vm299 = vcmp.ge.f32.partialorder %v291, 0.0
    %vm300 = vcmp.ge.f32.partialorder %v292, 0.0
    %vm301 = vcmp.ge.f32.partialorder %v293, 0.0
    %vm302 = vcmp.ge.f32.partialorder %v294, 0.0
    %v303 = vmul.f32 %v287, 0.01
    %v304 = vmul.f32 %v288, 0.01
    %v305 = vmul.f32 %v289, 0.01
    %v306 = vmul.f32 %v290, 0.01
    %v307 = vmul.f32 %v291, 0.01
    %v308 = vmul.f32 %v292, 0.01
    %v309 = vmul.f32 %v293, 0.01
    %v310 = vmul.f32 %v294, 0.01
    %v311 = vsel %vm295, %v287, %v303
    %v312 = vsel %vm296, %v288, %v304
    %v313 = vsel %vm297, %v289, %v305
    %v314 = vsel %vm298, %v290, %v306
    %v315 = vsel %vm299, %v291, %v307
    %v316 = vsel %vm300, %v292, %v308
    %v317 = vsel %vm301, %v293, %v309
    %v318 = vsel %vm302, %v294, %v310
    %v319 = vld [vmem:[%s3] sm:$0xf]
    %v320 = vld [vmem:[%s3 + $0x4] sm:$0xf]
    %v321 = vld [vmem:[%s3 + $0x8] sm:$0xf]
    %v322 = vld [vmem:[%s3 + $0xc] sm:$0xf]
    %v323 = vld [vmem:[%s3 + $0x10] sm:$0xf]
    %v324 = vld [vmem:[%s3 + $0x14] sm:$0xf]
    %v325 = vld [vmem:[%s3 + $0x18] sm:$0xf]
    %v326 = vld [vmem:[%s3 + $0x1c] sm:$0xf]
    %v327 = vld [vmem:[%s3 + $0x20] sm:$0xf]
    %v328 = vld [vmem:[%s3 + $0x24] sm:$0xf]
    %v329 = vld [vmem:[%s3 + $0x28] sm:$0xf]
    %v330 = vld [vmem:[%s3 + $0x2c] sm:$0xf]
    %v331 = vld [vmem:[%s3 + $0x30] sm:$0xf]
    %v332 = vld [vmem:[%s3 + $0x34] sm:$0xf]
    %v333 = vld [vmem:[%s3 + $0x38] sm:$0xf]
    %v334 = vld [vmem:[%s3 + $0x3c] sm:$0xf]
    %v335 = vpack.c.bf16 %v312, %v311
    %v336 = vpack.c.bf16 %v314, %v313
    %v337 = vpack.c.bf16 %v316, %v315
    %v338 = vpack.c.bf16 %v318, %v317
    %v339 = vld [vmem:[%s4] sm:$0xff]
    %v340 = vld [vmem:[%s4 + $0x8] sm:$0xff]
    %v341 = vld [vmem:[%s4 + $0x10] sm:$0xff]
    %v342 = vld [vmem:[%s4 + $0x18] sm:$0xff]
    %v343 = vld [vmem:[%s4 + $0x20] sm:$0xff]
    %v344 = vld [vmem:[%s4 + $0x28] sm:$0xff]
    %v345 = vld [vmem:[%s4 + $0x30] sm:$0xff]
    %v346 = vld [vmem:[%s4 + $0x38] sm:$0xff]
    %v347 = vld [vmem:[%s4 + $0x40] sm:$0xff]
    %v348 = vld [vmem:[%s4 + $0x48] sm:$0xff]
    %v349 = vld [vmem:[%s4 + $0x50] sm:$0xff]
    %v350 = vld [vmem:[%s4 + $0x58] sm:$0xff]
    %v351 = vld [vmem:[%s4 + $0x60] sm:$0xff]
    %v352 = vld [vmem:[%s4 + $0x68] sm:$0xff]
    %v353 = vld [vmem:[%s4 + $0x70] sm:$0xff]
    %v354 = vld [vmem:[%s4 + $0x78] sm:$0xff]
    %356 = vset.pattern.permute.xlu0 0
    %357 = vperm.xlu0 %356, %v339
    %v358 = vpop.permute.xlu0 %357
    %361 = vset.pattern.permute.xlu0 0
    %362 = vperm.xlu0 %361, %v340
    %v363 = vpop.permute.xlu0 %362
    %366 = vset.pattern.permute.xlu0 0
    %367 = vperm.xlu0 %366, %v341
    %v368 = vpop.permute.xlu0 %367
    %371 = vset.pattern.permute.xlu0 0
    %372 = vperm.xlu0 %371, %v342
    %v373 = vpop.permute.xlu0 %372
    %376 = vset.pattern.permute.xlu0 0
    %377 = vperm.xlu0 %376, %v343
    %v378 = vpop.permute.xlu0 %377
    %381 = vset.pattern.permute.xlu0 0
    %382 = vperm.xlu0 %381, %v344
    %v383 = vpop.permute.xlu0 %382
    %386 = vset.pattern.permute.xlu0 0
    %387 = vperm.xlu0 %386, %v345
    %v388 = vpop.permute.xlu0 %387
    %391 = vset.pattern.permute.xlu0 0
    %392 = vperm.xlu0 %391, %v346
    %v393 = vpop.permute.xlu0 %392
    %396 = vset.pattern.permute.xlu0 0
    %397 = vperm.xlu0 %396, %v347
    %v398 = vpop.permute.xlu0 %397
    %401 = vset.pattern.permute.xlu0 0
    %402 = vperm.xlu0 %401, %v348
    %v403 = vpop.permute.xlu0 %402
    %406 = vset.pattern.permute.xlu0 0
    %407 = vperm.xlu0 %406, %v349
    %v408 = vpop.permute.xlu0 %407
    %411 = vset.pattern.permute.xlu0 0
    %412 = vperm.xlu0 %411, %v350
    %v413 = vpop.permute.xlu0 %412
    %416 = vset.pattern.permute.xlu0 0
    %417 = vperm.xlu0 %416, %v351
    %v418 = vpop.permute.xlu0 %417
    %421 = vset.pattern.permute.xlu0 0
    %422 = vperm.xlu0 %421, %v352
    %v423 = vpop.permute.xlu0 %422
    %426 = vset.pattern.permute.xlu0 0
    %427 = vperm.xlu0 %426, %v353
    %v428 = vpop.permute.xlu0 %427
    %431 = vset.pattern.permute.xlu0 0
    %432 = vperm.xlu0 %431, %v354
    %v433 = vpop.permute.xlu0 %432
    %v451 = vunpack.c.l.b16 %v319
    %v452 = vunpack.c.l.b16 %v320
    %v453 = vunpack.c.l.b16 %v321
    %v454 = vunpack.c.l.b16 %v322
    %v455 = vunpack.c.l.b16 %v323
    %v456 = vunpack.c.l.b16 %v324
    %v457 = vunpack.c.l.b16 %v325
    %v458 = vunpack.c.l.b16 %v326
    %v459 = vunpack.c.l.b16 %v327
    %v460 = vunpack.c.l.b16 %v328
    %v461 = vunpack.c.l.b16 %v329
    %v462 = vunpack.c.l.b16 %v330
    %v463 = vunpack.c.l.b16 %v331
    %v464 = vunpack.c.l.b16 %v332
    %v465 = vunpack.c.l.b16 %v333
    %v466 = vunpack.c.l.b16 %v334
    %v467 = vpack.c.b16 %v452, %v451
    %v468 = vpack.c.b16 %v454, %v453
    %v469 = vpack.c.b16 %v456, %v455
    %v470 = vpack.c.b16 %v458, %v457
    %v471 = vpack.c.b16 %v460, %v459
    %v472 = vpack.c.b16 %v462, %v461
    %v473 = vpack.c.b16 %v464, %v463
    %v474 = vpack.c.b16 %v466, %v465
    %vm475 = vcmask 523264
    %v477 = vsel %vm475, %v467, 0
    %v480 = vsel %vm475, %v468, 0
    %v483 = vsel %vm475, %v469, 0
    %v486 = vsel %vm475, %v470, 0
    %v489 = vsel %vm475, %v471, 0
    %v492 = vsel %vm475, %v472, 0
    %v495 = vsel %vm475, %v473, 0
    %v498 = vsel %vm475, %v474, 0
    %500 = vmatpush.bf16.msra.mxu0 0
    %501 = vmatpush.bf16.msra.mxu0 0
    %502 = vmatpush.bf16.msra.mxu0 0
    %503 = vmatpush.bf16.msra.mxu0 0
    %504 = vmatpush.bf16.msra.mxu0 %v338
    %505 = vmatpush.bf16.msra.mxu0 %v337
    %506 = vmatpush.bf16.msra.mxu0 %v336
    %507 = vmatpush.bf16.msra.mxu0 %v335
    %508 = vmatmul.bf16.gmra.mxu0 %v477
    %v509 = vpop.f32.mrf.mxu0
    %v510 = vadd.f32 %v358, %v509
    %v511 = vpop.f32.mrf.mxu0
    %v512 = vadd.f32 %v363, %v511
    %513 = vmatmul.bf16.gmra.mxu0 %v480
    %v514 = vpop.f32.mrf.mxu0
    %v515 = vadd.f32 %v368, %v514
    %v516 = vpop.f32.mrf.mxu0
    %v517 = vadd.f32 %v373, %v516
    %518 = vmatmul.bf16.gmra.mxu0 %v483
    %v519 = vpop.f32.mrf.mxu0
    %v520 = vadd.f32 %v378, %v519
    %v521 = vpop.f32.mrf.mxu0
    %v522 = vadd.f32 %v383, %v521
    %523 = vmatmul.bf16.gmra.mxu0 %v486
    %v524 = vpop.f32.mrf.mxu0
    %v525 = vadd.f32 %v388, %v524
    %v526 = vpop.f32.mrf.mxu0
    %v527 = vadd.f32 %v393, %v526
    %528 = vmatmul.bf16.gmra.mxu0 %v489
    %v529 = vpop.f32.mrf.mxu0
    %v530 = vadd.f32 %v398, %v529
    %v531 = vpop.f32.mrf.mxu0
    %v532 = vadd.f32 %v403, %v531
    %533 = vmatmul.bf16.gmra.mxu0 %v492
    %v534 = vpop.f32.mrf.mxu0
    %v535 = vadd.f32 %v408, %v534
    %v536 = vpop.f32.mrf.mxu0
    %v537 = vadd.f32 %v413, %v536
    %538 = vmatmul.bf16.gmra.mxu0 %v495
    %v539 = vpop.f32.mrf.mxu0
    %v540 = vadd.f32 %v418, %v539
    %v541 = vpop.f32.mrf.mxu0
    %v542 = vadd.f32 %v423, %v541
    %543 = vmatmul.bf16.gmra.mxu0 %v498
    %v544 = vpop.f32.mrf.mxu0
    %v545 = vadd.f32 %v428, %v544
    %v546 = vpop.f32.mrf.mxu0
    %v547 = vadd.f32 %v433, %v546
    %548 = vdwg.mxu0
    %vm549 = vcmp.ge.f32.partialorder %v510, 0.0
    %vm550 = vcmp.ge.f32.partialorder %v512, 0.0
    %vm551 = vcmp.ge.f32.partialorder %v515, 0.0
    %vm552 = vcmp.ge.f32.partialorder %v517, 0.0
    %vm553 = vcmp.ge.f32.partialorder %v520, 0.0
    %vm554 = vcmp.ge.f32.partialorder %v522, 0.0
    %vm555 = vcmp.ge.f32.partialorder %v525, 0.0
    %vm556 = vcmp.ge.f32.partialorder %v527, 0.0
    %vm557 = vcmp.ge.f32.partialorder %v530, 0.0
    %vm558 = vcmp.ge.f32.partialorder %v532, 0.0
    %vm559 = vcmp.ge.f32.partialorder %v535, 0.0
    %vm560 = vcmp.ge.f32.partialorder %v537, 0.0
    %vm561 = vcmp.ge.f32.partialorder %v540, 0.0
    %vm562 = vcmp.ge.f32.partialorder %v542, 0.0
    %vm563 = vcmp.ge.f32.partialorder %v545, 0.0
    %vm564 = vcmp.ge.f32.partialorder %v547, 0.0
    %v565 = vmul.f32 %v510, 0.01
    %v566 = vmul.f32 %v512, 0.01
    %v567 = vmul.f32 %v515, 0.01
    %v568 = vmul.f32 %v517, 0.01
    %v569 = vmul.f32 %v520, 0.01
    %v570 = vmul.f32 %v522, 0.01
    %v571 = vmul.f32 %v525, 0.01
    %v572 = vmul.f32 %v527, 0.01
    %v573 = vmul.f32 %v530, 0.01
    %v574 = vmul.f32 %v532, 0.01
    %v575 = vmul.f32 %v535, 0.01
    %v576 = vmul.f32 %v537, 0.01
    %v577 = vmul.f32 %v540, 0.01
    %v578 = vmul.f32 %v542, 0.01
    %v579 = vmul.f32 %v545, 0.01
    %v580 = vmul.f32 %v547, 0.01
    %v581 = vsel %vm549, %v510, %v565
    %v582 = vsel %vm550, %v512, %v566
    %v583 = vsel %vm551, %v515, %v567
    %v584 = vsel %vm552, %v517, %v568
    %v585 = vsel %vm553, %v520, %v569
    %v586 = vsel %vm554, %v522, %v570
    %v587 = vsel %vm555, %v525, %v571
    %v588 = vsel %vm556, %v527, %v572
    %v589 = vsel %vm557, %v530, %v573
    %v590 = vsel %vm558, %v532, %v574
    %v591 = vsel %vm559, %v535, %v575
    %v592 = vsel %vm560, %v537, %v576
    %v593 = vsel %vm561, %v540, %v577
    %v594 = vsel %vm562, %v542, %v578
    %v595 = vsel %vm563, %v545, %v579
    %v596 = vsel %vm564, %v547, %v580
    %v597 = vld [vmem:[%s5] sm:$0xf]
    %v598 = vld [vmem:[%s5 + $0x4] sm:$0xf]
    %v599 = vld [vmem:[%s5 + $0x8] sm:$0xf]
    %v600 = vld [vmem:[%s5 + $0xc] sm:$0xf]
    %v601 = vld [vmem:[%s5 + $0x10] sm:$0xf]
    %v602 = vld [vmem:[%s5 + $0x14] sm:$0xf]
    %v603 = vld [vmem:[%s5 + $0x18] sm:$0xf]
    %v604 = vld [vmem:[%s5 + $0x1c] sm:$0xf]
    %v605 = vld [vmem:[%s5 + $0x20] sm:$0xf]
    %v606 = vld [vmem:[%s5 + $0x24] sm:$0xf]
    %v607 = vld [vmem:[%s5 + $0x28] sm:$0xf]
    %v608 = vld [vmem:[%s5 + $0x2c] sm:$0xf]
    %v609 = vld [vmem:[%s5 + $0x30] sm:$0xf]
    %v610 = vld [vmem:[%s5 + $0x34] sm:$0xf]
    %v611 = vld [vmem:[%s5 + $0x38] sm:$0xf]
    %v612 = vld [vmem:[%s5 + $0x3c] sm:$0xf]
    %v613 = vld [vmem:[%s5 + $0x40] sm:$0xf]
    %v614 = vld [vmem:[%s5 + $0x44] sm:$0xf]
    %v615 = vld [vmem:[%s5 + $0x48] sm:$0xf]
    %v616 = vld [vmem:[%s5 + $0x4c] sm:$0xf]
    %v617 = vld [vmem:[%s5 + $0x50] sm:$0xf]
    %v618 = vld [vmem:[%s5 + $0x54] sm:$0xf]
    %v619 = vld [vmem:[%s5 + $0x58] sm:$0xf]
    %v620 = vld [vmem:[%s5 + $0x5c] sm:$0xf]
    %v621 = vld [vmem:[%s5 + $0x60] sm:$0xf]
    %v622 = vld [vmem:[%s5 + $0x64] sm:$0xf]
    %v623 = vld [vmem:[%s5 + $0x68] sm:$0xf]
    %v624 = vld [vmem:[%s5 + $0x6c] sm:$0xf]
    %v625 = vld [vmem:[%s5 + $0x70] sm:$0xf]
    %v626 = vld [vmem:[%s5 + $0x74] sm:$0xf]
    %v627 = vld [vmem:[%s5 + $0x78] sm:$0xf]
    %v628 = vld [vmem:[%s5 + $0x7c] sm:$0xf]
    %v629 = vpack.c.bf16 %v582, %v581
    %v630 = vpack.c.bf16 %v584, %v583
    %v631 = vpack.c.bf16 %v586, %v585
    %v632 = vpack.c.bf16 %v588, %v587
    %v633 = vpack.c.bf16 %v590, %v589
    %v634 = vpack.c.bf16 %v592, %v591
    %v635 = vpack.c.bf16 %v594, %v593
    %v636 = vpack.c.bf16 %v596, %v595
    %v637 = vld [vmem:[%s6] sm:$0xff]
    %v638 = vld [vmem:[%s6 + $0x8] sm:$0xff]
    %v639 = vld [vmem:[%s6 + $0x10] sm:$0xff]
    %v640 = vld [vmem:[%s6 + $0x18] sm:$0xff]
    %v641 = vld [vmem:[%s6 + $0x20] sm:$0xff]
    %v642 = vld [vmem:[%s6 + $0x28] sm:$0xff]
    %v643 = vld [vmem:[%s6 + $0x30] sm:$0xff]
    %v644 = vld [vmem:[%s6 + $0x38] sm:$0xff]
    %v645 = vld [vmem:[%s6 + $0x40] sm:$0xff]
    %v646 = vld [vmem:[%s6 + $0x48] sm:$0xff]
    %v647 = vld [vmem:[%s6 + $0x50] sm:$0xff]
    %v648 = vld [vmem:[%s6 + $0x58] sm:$0xff]
    %v649 = vld [vmem:[%s6 + $0x60] sm:$0xff]
    %v650 = vld [vmem:[%s6 + $0x68] sm:$0xff]
    %v651 = vld [vmem:[%s6 + $0x70] sm:$0xff]
    %v652 = vld [vmem:[%s6 + $0x78] sm:$0xff]
    %v653 = vld [vmem:[%s6 + $0x80] sm:$0xff]
    %v654 = vld [vmem:[%s6 + $0x88] sm:$0xff]
    %v655 = vld [vmem:[%s6 + $0x90] sm:$0xff]
    %v656 = vld [vmem:[%s6 + $0x98] sm:$0xff]
    %v657 = vld [vmem:[%s6 + $0xa0] sm:$0xff]
    %v658 = vld [vmem:[%s6 + $0xa8] sm:$0xff]
    %v659 = vld [vmem:[%s6 + $0xb0] sm:$0xff]
    %v660 = vld [vmem:[%s6 + $0xb8] sm:$0xff]
    %v661 = vld [vmem:[%s6 + $0xc0] sm:$0xff]
    %v662 = vld [vmem:[%s6 + $0xc8] sm:$0xff]
    %v663 = vld [vmem:[%s6 + $0xd0] sm:$0xff]
    %v664 = vld [vmem:[%s6 + $0xd8] sm:$0xff]
    %v665 = vld [vmem:[%s6 + $0xe0] sm:$0xff]
    %v666 = vld [vmem:[%s6 + $0xe8] sm:$0xff]
    %v667 = vld [vmem:[%s6 + $0xf0] sm:$0xff]
    %v668 = vld [vmem:[%s6 + $0xf8] sm:$0xff]
    %670 = vset.pattern.permute.xlu0 0
    %671 = vperm.xlu0 %670, %v637
    %v672 = vpop.permute.xlu0 %671
    %675 = vset.pattern.permute.xlu0 0
    %676 = vperm.xlu0 %675, %v638
    %v677 = vpop.permute.xlu0 %676
    %680 = vset.pattern.permute.xlu0 0
    %681 = vperm.xlu0 %680, %v639
    %v682 = vpop.permute.xlu0 %681
    %685 = vset.pattern.permute.xlu0 0
    %686 = vperm.xlu0 %685, %v640
    %v687 = vpop.permute.xlu0 %686
    %690 = vset.pattern.permute.xlu0 0
    %691 = vperm.xlu0 %690, %v641
    %v692 = vpop.permute.xlu0 %691
    %695 = vset.pattern.permute.xlu0 0
    %696 = vperm.xlu0 %695, %v642
    %v697 = vpop.permute.xlu0 %696
    %700 = vset.pattern.permute.xlu0 0
    %701 = vperm.xlu0 %700, %v643
    %v702 = vpop.permute.xlu0 %701
    %705 = vset.pattern.permute.xlu0 0
    %706 = vperm.xlu0 %705, %v644
    %v707 = vpop.permute.xlu0 %706
    %710 = vset.pattern.permute.xlu0 0
    %711 = vperm.xlu0 %710, %v645
    %v712 = vpop.permute.xlu0 %711
    %715 = vset.pattern.permute.xlu0 0
    %716 = vperm.xlu0 %715, %v646
    %v717 = vpop.permute.xlu0 %716
    %720 = vset.pattern.permute.xlu0 0
    %721 = vperm.xlu0 %720, %v647
    %v722 = vpop.permute.xlu0 %721
    %725 = vset.pattern.permute.xlu0 0
    %726 = vperm.xlu0 %725, %v648
    %v727 = vpop.permute.xlu0 %726
    %730 = vset.pattern.permute.xlu0 0
    %731 = vperm.xlu0 %730, %v649
    %v732 = vpop.permute.xlu0 %731
    %735 = vset.pattern.permute.xlu0 0
    %736 = vperm.xlu0 %735, %v650
    %v737 = vpop.permute.xlu0 %736
    %740 = vset.pattern.permute.xlu0 0
    %741 = vperm.xlu0 %740, %v651
    %v742 = vpop.permute.xlu0 %741
    %745 = vset.pattern.permute.xlu0 0
    %746 = vperm.xlu0 %745, %v652
    %v747 = vpop.permute.xlu0 %746
    %750 = vset.pattern.permute.xlu0 0
    %751 = vperm.xlu0 %750, %v653
    %v752 = vpop.permute.xlu0 %751
    %755 = vset.pattern.permute.xlu0 0
    %756 = vperm.xlu0 %755, %v654
    %v757 = vpop.permute.xlu0 %756
    %760 = vset.pattern.permute.xlu0 0
    %761 = vperm.xlu0 %760, %v655
    %v762 = vpop.permute.xlu0 %761
    %765 = vset.pattern.permute.xlu0 0
    %766 = vperm.xlu0 %765, %v656
    %v767 = vpop.permute.xlu0 %766
    %770 = vset.pattern.permute.xlu0 0
    %771 = vperm.xlu0 %770, %v657
    %v772 = vpop.permute.xlu0 %771
    %775 = vset.pattern.permute.xlu0 0
    %776 = vperm.xlu0 %775, %v658
    %v777 = vpop.permute.xlu0 %776
    %780 = vset.pattern.permute.xlu0 0
    %781 = vperm.xlu0 %780, %v659
    %v782 = vpop.permute.xlu0 %781
    %785 = vset.pattern.permute.xlu0 0
    %786 = vperm.xlu0 %785, %v660
    %v787 = vpop.permute.xlu0 %786
    %790 = vset.pattern.permute.xlu0 0
    %791 = vperm.xlu0 %790, %v661
    %v792 = vpop.permute.xlu0 %791
    %795 = vset.pattern.permute.xlu0 0
    %796 = vperm.xlu0 %795, %v662
    %v797 = vpop.permute.xlu0 %796
    %800 = vset.pattern.permute.xlu0 0
    %801 = vperm.xlu0 %800, %v663
    %v802 = vpop.permute.xlu0 %801
    %805 = vset.pattern.permute.xlu0 0
    %806 = vperm.xlu0 %805, %v664
    %v807 = vpop.permute.xlu0 %806
    %810 = vset.pattern.permute.xlu0 0
    %811 = vperm.xlu0 %810, %v665
    %v812 = vpop.permute.xlu0 %811
    %815 = vset.pattern.permute.xlu0 0
    %816 = vperm.xlu0 %815, %v666
    %v817 = vpop.permute.xlu0 %816
    %820 = vset.pattern.permute.xlu0 0
    %821 = vperm.xlu0 %820, %v667
    %v822 = vpop.permute.xlu0 %821
    %825 = vset.pattern.permute.xlu0 0
    %826 = vperm.xlu0 %825, %v668
    %v827 = vpop.permute.xlu0 %826
    %v861 = vunpack.c.l.b16 %v597
    %v862 = vunpack.c.l.b16 %v598
    %v863 = vunpack.c.l.b16 %v599
    %v864 = vunpack.c.l.b16 %v600
    %v865 = vunpack.c.l.b16 %v601
    %v866 = vunpack.c.l.b16 %v602
    %v867 = vunpack.c.l.b16 %v603
    %v868 = vunpack.c.l.b16 %v604
    %v869 = vunpack.c.l.b16 %v605
    %v870 = vunpack.c.l.b16 %v606
    %v871 = vunpack.c.l.b16 %v607
    %v872 = vunpack.c.l.b16 %v608
    %v873 = vunpack.c.l.b16 %v609
    %v874 = vunpack.c.l.b16 %v610
    %v875 = vunpack.c.l.b16 %v611
    %v876 = vunpack.c.l.b16 %v612
    %v877 = vunpack.c.l.b16 %v613
    %v878 = vunpack.c.l.b16 %v614
    %v879 = vunpack.c.l.b16 %v615
    %v880 = vunpack.c.l.b16 %v616
    %v881 = vunpack.c.l.b16 %v617
    %v882 = vunpack.c.l.b16 %v618
    %v883 = vunpack.c.l.b16 %v619
    %v884 = vunpack.c.l.b16 %v620
    %v885 = vunpack.c.l.b16 %v621
    %v886 = vunpack.c.l.b16 %v622
    %v887 = vunpack.c.l.b16 %v623
    %v888 = vunpack.c.l.b16 %v624
    %v889 = vunpack.c.l.b16 %v625
    %v890 = vunpack.c.l.b16 %v626
    %v891 = vunpack.c.l.b16 %v627
    %v892 = vunpack.c.l.b16 %v628
    %v893 = vpack.c.b16 %v862, %v861
    %v894 = vpack.c.b16 %v864, %v863
    %v895 = vpack.c.b16 %v866, %v865
    %v896 = vpack.c.b16 %v868, %v867
    %v897 = vpack.c.b16 %v870, %v869
    %v898 = vpack.c.b16 %v872, %v871
    %v899 = vpack.c.b16 %v874, %v873
    %v900 = vpack.c.b16 %v876, %v875
    %v901 = vpack.c.b16 %v878, %v877
    %v902 = vpack.c.b16 %v880, %v879
    %v903 = vpack.c.b16 %v882, %v881
    %v904 = vpack.c.b16 %v884, %v883
    %v905 = vpack.c.b16 %v886, %v885
    %v906 = vpack.c.b16 %v888, %v887
    %v907 = vpack.c.b16 %v890, %v889
    %v908 = vpack.c.b16 %v892, %v891
    %925 = vmatpush.bf16.msra.mxu0 %v636
    %926 = vmatpush.bf16.msra.mxu0 %v635
    %927 = vmatpush.bf16.msra.mxu0 %v634
    %928 = vmatpush.bf16.msra.mxu0 %v633
    %929 = vmatpush.bf16.msra.mxu0 %v632
    %930 = vmatpush.bf16.msra.mxu0 %v631
    %931 = vmatpush.bf16.msra.mxu0 %v630
    %932 = vmatpush.bf16.msra.mxu0 %v629
    %933 = vmatmul.bf16.gmra.mxu0 %v893
    %v934 = vpop.f32.mrf.mxu0
    %v935 = vadd.f32 %v672, %v934
    %v936 = vpop.f32.mrf.mxu0
    %v937 = vadd.f32 %v677, %v936
    %938 = vmatmul.bf16.gmra.mxu0 %v894
    %v939 = vpop.f32.mrf.mxu0
    %v940 = vadd.f32 %v682, %v939
    %v941 = vpop.f32.mrf.mxu0
    %v942 = vadd.f32 %v687, %v941
    %943 = vmatmul.bf16.gmra.mxu0 %v895
    %v944 = vpop.f32.mrf.mxu0
    %v945 = vadd.f32 %v692, %v944
    %v946 = vpop.f32.mrf.mxu0
    %v947 = vadd.f32 %v697, %v946
    %948 = vmatmul.bf16.gmra.mxu0 %v896
    %v949 = vpop.f32.mrf.mxu0
    %v950 = vadd.f32 %v702, %v949
    %v951 = vpop.f32.mrf.mxu0
    %v952 = vadd.f32 %v707, %v951
    %953 = vmatmul.bf16.gmra.mxu0 %v897
    %v954 = vpop.f32.mrf.mxu0
    %v955 = vadd.f32 %v712, %v954
    %v956 = vpop.f32.mrf.mxu0
    %v957 = vadd.f32 %v717, %v956
    %958 = vmatmul.bf16.gmra.mxu0 %v898
    %v959 = vpop.f32.mrf.mxu0
    %v960 = vadd.f32 %v722, %v959
    %v961 = vpop.f32.mrf.mxu0
    %v962 = vadd.f32 %v727, %v961
    %963 = vmatmul.bf16.gmra.mxu0 %v899
    %v964 = vpop.f32.mrf.mxu0
    %v965 = vadd.f32 %v732, %v964
    %v966 = vpop.f32.mrf.mxu0
    %v967 = vadd.f32 %v737, %v966
    %968 = vmatmul.bf16.gmra.mxu0 %v900
    %v969 = vpop.f32.mrf.mxu0
    %v970 = vadd.f32 %v742, %v969
    %v971 = vpop.f32.mrf.mxu0
    %v972 = vadd.f32 %v747, %v971
    %973 = vmatmul.bf16.gmra.mxu0 %v901
    %v974 = vpop.f32.mrf.mxu0
    %v975 = vadd.f32 %v752, %v974
    %v976 = vpop.f32.mrf.mxu0
    %v977 = vadd.f32 %v757, %v976
    %978 = vmatmul.bf16.gmra.mxu0 %v902
    %v979 = vpop.f32.mrf.mxu0
    %v980 = vadd.f32 %v762, %v979
    %v981 = vpop.f32.mrf.mxu0
    %v982 = vadd.f32 %v767, %v981
    %983 = vmatmul.bf16.gmra.mxu0 %v903
    %v984 = vpop.f32.mrf.mxu0
    %v985 = vadd.f32 %v772, %v984
    %v986 = vpop.f32.mrf.mxu0
    %v987 = vadd.f32 %v777, %v986
    %988 = vmatmul.bf16.gmra.mxu0 %v904
    %v989 = vpop.f32.mrf.mxu0
    %v990 = vadd.f32 %v782, %v989
    %v991 = vpop.f32.mrf.mxu0
    %v992 = vadd.f32 %v787, %v991
    %993 = vmatmul.bf16.gmra.mxu0 %v905
    %v994 = vpop.f32.mrf.mxu0
    %v995 = vadd.f32 %v792, %v994
    %v996 = vpop.f32.mrf.mxu0
    %v997 = vadd.f32 %v797, %v996
    %998 = vmatmul.bf16.gmra.mxu0 %v906
    %v999 = vpop.f32.mrf.mxu0
    %v1000 = vadd.f32 %v802, %v999
    %v1001 = vpop.f32.mrf.mxu0
    %v1002 = vadd.f32 %v807, %v1001
    %1003 = vmatmul.bf16.gmra.mxu0 %v907
    %v1004 = vpop.f32.mrf.mxu0
    %v1005 = vadd.f32 %v812, %v1004
    %v1006 = vpop.f32.mrf.mxu0
    %v1007 = vadd.f32 %v817, %v1006
    %1008 = vmatmul.bf16.gmra.mxu0 %v908
    %v1009 = vpop.f32.mrf.mxu0
    %v1010 = vadd.f32 %v822, %v1009
    %v1011 = vpop.f32.mrf.mxu0
    %v1012 = vadd.f32 %v827, %v1011
    %1013 = vdwg.mxu0
    %vm1014 = vcmp.ge.f32.partialorder %v935, 0.0
    %vm1015 = vcmp.ge.f32.partialorder %v937, 0.0
    %vm1016 = vcmp.ge.f32.partialorder %v940, 0.0
    %vm1017 = vcmp.ge.f32.partialorder %v942, 0.0
    %vm1018 = vcmp.ge.f32.partialorder %v945, 0.0
    %vm1019 = vcmp.ge.f32.partialorder %v947, 0.0
    %vm1020 = vcmp.ge.f32.partialorder %v950, 0.0
    %vm1021 = vcmp.ge.f32.partialorder %v952, 0.0
    %vm1022 = vcmp.ge.f32.partialorder %v955, 0.0
    %vm1023 = vcmp.ge.f32.partialorder %v957, 0.0
    %vm1024 = vcmp.ge.f32.partialorder %v960, 0.0
    %vm1025 = vcmp.ge.f32.partialorder %v962, 0.0
    %vm1026 = vcmp.ge.f32.partialorder %v965, 0.0
    %vm1027 = vcmp.ge.f32.partialorder %v967, 0.0
    %vm1028 = vcmp.ge.f32.partialorder %v970, 0.0
    %vm1029 = vcmp.ge.f32.partialorder %v972, 0.0
    %vm1030 = vcmp.ge.f32.partialorder %v975, 0.0
    %vm1031 = vcmp.ge.f32.partialorder %v977, 0.0
    %vm1032 = vcmp.ge.f32.partialorder %v980, 0.0
    %vm1033 = vcmp.ge.f32.partialorder %v982, 0.0
    %vm1034 = vcmp.ge.f32.partialorder %v985, 0.0
    %vm1035 = vcmp.ge.f32.partialorder %v987, 0.0
    %vm1036 = vcmp.ge.f32.partialorder %v990, 0.0
    %vm1037 = vcmp.ge.f32.partialorder %v992, 0.0
    %vm1038 = vcmp.ge.f32.partialorder %v995, 0.0
    %vm1039 = vcmp.ge.f32.partialorder %v997, 0.0
    %vm1040 = vcmp.ge.f32.partialorder %v1000, 0.0
    %vm1041 = vcmp.ge.f32.partialorder %v1002, 0.0
    %vm1042 = vcmp.ge.f32.partialorder %v1005, 0.0
    %vm1043 = vcmp.ge.f32.partialorder %v1007, 0.0
    %vm1044 = vcmp.ge.f32.partialorder %v1010, 0.0
    %vm1045 = vcmp.ge.f32.partialorder %v1012, 0.0
    %v1046 = vmul.f32 %v935, 0.01
    %v1047 = vmul.f32 %v937, 0.01
    %v1048 = vmul.f32 %v940, 0.01
    %v1049 = vmul.f32 %v942, 0.01
    %v1050 = vmul.f32 %v945, 0.01
    %v1051 = vmul.f32 %v947, 0.01
    %v1052 = vmul.f32 %v950, 0.01
    %v1053 = vmul.f32 %v952, 0.01
    %v1054 = vmul.f32 %v955, 0.01
    %v1055 = vmul.f32 %v957, 0.01
    %v1056 = vmul.f32 %v960, 0.01
    %v1057 = vmul.f32 %v962, 0.01
    %v1058 = vmul.f32 %v965, 0.01
    %v1059 = vmul.f32 %v967, 0.01
    %v1060 = vmul.f32 %v970, 0.01
    %v1061 = vmul.f32 %v972, 0.01
    %v1062 = vmul.f32 %v975, 0.01
    %v1063 = vmul.f32 %v977, 0.01
    %v1064 = vmul.f32 %v980, 0.01
    %v1065 = vmul.f32 %v982, 0.01
    %v1066 = vmul.f32 %v985, 0.01
    %v1067 = vmul.f32 %v987, 0.01
    %v1068 = vmul.f32 %v990, 0.01
    %v1069 = vmul.f32 %v992, 0.01
    %v1070 = vmul.f32 %v995, 0.01
    %v1071 = vmul.f32 %v997, 0.01
    %v1072 = vmul.f32 %v1000, 0.01
    %v1073 = vmul.f32 %v1002, 0.01
    %v1074 = vmul.f32 %v1005, 0.01
    %v1075 = vmul.f32 %v1007, 0.01
    %v1076 = vmul.f32 %v1010, 0.01
    %v1077 = vmul.f32 %v1012, 0.01
    %v1078 = vsel %vm1014, %v935, %v1046
    %v1079 = vsel %vm1015, %v937, %v1047
    %v1080 = vsel %vm1016, %v940, %v1048
    %v1081 = vsel %vm1017, %v942, %v1049
    %v1082 = vsel %vm1018, %v945, %v1050
    %v1083 = vsel %vm1019, %v947, %v1051
    %v1084 = vsel %vm1020, %v950, %v1052
    %v1085 = vsel %vm1021, %v952, %v1053
    %v1086 = vsel %vm1022, %v955, %v1054
    %v1087 = vsel %vm1023, %v957, %v1055
    %v1088 = vsel %vm1024, %v960, %v1056
    %v1089 = vsel %vm1025, %v962, %v1057
    %v1090 = vsel %vm1026, %v965, %v1058
    %v1091 = vsel %vm1027, %v967, %v1059
    %v1092 = vsel %vm1028, %v970, %v1060
    %v1093 = vsel %vm1029, %v972, %v1061
    %v1094 = vsel %vm1030, %v975, %v1062
    %v1095 = vsel %vm1031, %v977, %v1063
    %v1096 = vsel %vm1032, %v980, %v1064
    %v1097 = vsel %vm1033, %v982, %v1065
    %v1098 = vsel %vm1034, %v985, %v1066
    %v1099 = vsel %vm1035, %v987, %v1067
    %v1100 = vsel %vm1036, %v990, %v1068
    %v1101 = vsel %vm1037, %v992, %v1069
    %v1102 = vsel %vm1038, %v995, %v1070
    %v1103 = vsel %vm1039, %v997, %v1071
    %v1104 = vsel %vm1040, %v1000, %v1072
    %v1105 = vsel %vm1041, %v1002, %v1073
    %v1106 = vsel %vm1042, %v1005, %v1074
    %v1107 = vsel %vm1043, %v1007, %v1075
    %v1108 = vsel %vm1044, %v1010, %v1076
    %v1109 = vsel %vm1045, %v1012, %v1077
    %v1110 = vld [vmem:[%s7] sm:$0xf]
    %v1111 = vpack.c.bf16 %v1079, %v1078
    %v1112 = vpack.c.bf16 %v1081, %v1080
    %v1113 = vpack.c.bf16 %v1083, %v1082
    %v1114 = vpack.c.bf16 %v1085, %v1084
    %v1115 = vpack.c.bf16 %v1087, %v1086
    %v1116 = vpack.c.bf16 %v1089, %v1088
    %v1117 = vpack.c.bf16 %v1091, %v1090
    %v1118 = vpack.c.bf16 %v1093, %v1092
    %v1119 = vpack.c.bf16 %v1095, %v1094
    %v1120 = vpack.c.bf16 %v1097, %v1096
    %v1121 = vpack.c.bf16 %v1099, %v1098
    %v1122 = vpack.c.bf16 %v1101, %v1100
    %v1123 = vpack.c.bf16 %v1103, %v1102
    %v1124 = vpack.c.bf16 %v1105, %v1104
    %v1125 = vpack.c.bf16 %v1107, %v1106
    %v1126 = vpack.c.bf16 %v1109, %v1108
    %v1127 = vld [vmem:[%s8] sm:$0x7]
    %1129 = vset.pattern.permute.xlu0 0
    %1130 = vperm.xlu0 %1129, %v1127
    %v1131 = vpop.permute.xlu0 %1130
    %1134 = vst [vmem:[#allocation1] ss:$4 sm:$0xff] %v1110
    %v1135 = vld.sshfl [vmem:[#allocation1] sm:$0xff pattern:$0x73625140]
    %v1136 = vld.sshfl [vmem:[#allocation1 + $0x8] sm:$0xff pattern:$0x73625140]
    %1139 = vmatpush.bf16.msra.mxu0 %v1118
    %1140 = vmatpush.bf16.msra.mxu0 %v1117
    %1141 = vmatpush.bf16.msra.mxu0 %v1116
    %1142 = vmatpush.bf16.msra.mxu0 %v1115
    %1143 = vmatpush.bf16.msra.mxu0 %v1114
    %1144 = vmatpush.bf16.msra.mxu0 %v1113
    %1145 = vmatpush.bf16.msra.mxu0 %v1112
    %1146 = vmatpush.bf16.msra.mxu0 %v1111
    %1147 = vmatmul.bf16.gmra.mxu0 %v1135
    %v1148 = vpop.f32.mrf.mxu0
    %v1149 = vadd.f32 %v1131, %v1148
    %v1150 = vpop.f32.mrf.mxu0
    %1151 = vdwg.mxu0
    %1152 = vmatpush.bf16.msra.mxu0 %v1126
    %1153 = vmatpush.bf16.msra.mxu0 %v1125
    %1154 = vmatpush.bf16.msra.mxu0 %v1124
    %1155 = vmatpush.bf16.msra.mxu0 %v1123
    %1156 = vmatpush.bf16.msra.mxu0 %v1122
    %1157 = vmatpush.bf16.msra.mxu0 %v1121
    %1158 = vmatpush.bf16.msra.mxu0 %v1120
    %1159 = vmatpush.bf16.msra.mxu0 %v1119
    %1160 = vmatmul.bf16.gmra.mxu0 %v1136
    %v1161 = vpop.f32.mrf.mxu0
    %v1162 = vadd.f32 %v1149, %v1161
    %v1163 = vpop.f32.mrf.mxu0
    %1164 = vdwg.mxu0
    %vm1165 = vcmask 59392
    %1166 = vst.msk [vmem:[#allocation2] sm:$0x7] %vm1165, %v1162
    // Predicated region
    $region38: #{tpu_custom_call.1} parent=1 // pred_check
      _
    $region39: #{tpu_custom_call.1} parent=1 // pred_check_branch
      %1168 = sbr.rel (0) target = $region41
    $region40: #{tpu_custom_call.1} parent=1 // pred_region
      %1170 = vsyncadd [#allocation3], 0
      %s1172 = sshll.u32 [#allocation2], 4
      %s1173 = int_to_ptr.vmem [resolvable:$true] %s1172
      %s1174 = sshll.u32 %s9, 4
      %s1175 = int_to_ptr.hbm [resolvable:$true] %s1174
      %1177 = dma.vmem_to_hbm [thread:$0]  %s1173, 64, %s1175, [#allocation3]
    $region41: #{tpu_custom_call.1} parent=1 // pred_fallthru
      _
    // Predicated region
    $region42: #{tpu_custom_call.1} parent=1 // pred_check
      _
    $region43: #{tpu_custom_call.1} parent=1 // pred_check_branch
      %1179 = sbr.rel (0) target = $region45
    $region44: #{tpu_custom_call.1} parent=1 // pred_region
      %1181 = dma.done [#allocation3], 64
    $region45: #{tpu_custom_call.1} parent=1 // pred_fallthru
      _
    %1182 = vsyncpa [#allocation3], 1

</llo_original>
